<compile_context>
chip_gen: v7x
topology: tpu7x:2x2x1
jax: 0.10.0
libtpu: 0.0.40
codegen_flags: <defaults>
</compile_context>

<pallas_src>
import jax
import jax.numpy as jnp
from jax.experimental import pallas as pl
from jax.experimental.pallas import tpu as pltpu


# ----------------------------------------------------------------------------
# VMEM / tile sizing helpers (lane-padding aware, generation aware)
# ----------------------------------------------------------------------------

def _vmem_capacity_bytes():
    """Per-core VMEM capacity; conservative (v7x-sized) fallback if unknown."""
    try:
        info = pltpu.get_tpu_info()
        for attr in ("vmem_capacity_bytes", "vmem_bytes", "vmem_size_bytes"):
            val = getattr(info, attr, None)
            if val:
                return int(val)
    except Exception:
        pass
    return 64 * 1024 * 1024


def _lane_bytes(itemsize, cols):
    """Bytes per row of an (R, cols) VMEM buffer: lanes pad to multiples of 128."""
    return ((cols + 127) // 128) * 128 * itemsize


def _tile_candidates(n):
    """Divisors of n satisfying the sublane constraint (multiples of 8)."""
    return sorted(d for d in range(8, n + 1) if n % d == 0 and d % 8 == 0)


def _choose_tiles(n, batch, fe1, h, cdt_isz, out_isz, budget_bytes,
                  max_rows=32768):
    """Pick (TI, TJ): largest TI*TJ slab whose lane-padded VMEM fits the budget."""
    cands = _tile_candidates(n)
    # Per (i, j) message-row VMEM cost (every <=128-lane buffer pads to 128 lanes):
    #   adj+mask input  : 2 pipeline buffers
    #   adjp     output : 2 pipeline buffers
    #   f32 intermediates: one 3H-wide proj + ~6 H-wide temporaries live at once
    row = (2 * _lane_bytes(cdt_isz, fe1)
           + 2 * _lane_bytes(out_isz, h)
           + 2 * _lane_bytes(4, 3 * h)
           + 6 * _lane_bytes(4, h))
    # When B == 1, prefer splitting j so the second grid axis can feed a second
    # TensorCore (v7x) / megacore half; otherwise prefer TJ == n (contiguous DMA).
    tj_cands = cands
    if batch < 2 and len(cands) > 1:
        tj_cands = [d for d in cands if d < n] or cands

    best_ti, best_tj, best_tm = cands[0], cands[0], 0
    for tj in tj_cands:
        for ti in cands:
            tm = ti * tj
            if tm > max_rows:
                continue
            node_rows = 2 * (3 * tj + ti)          # xp/xj/new_x + xi blocks, x2 buffers
            need = tm * row + node_rows * _lane_bytes(4, h) + (1 << 20)
            if need <= budget_bytes and (tm > best_tm or
                                         (tm == best_tm and tj > best_tj)):
                best_ti, best_tj, best_tm = ti, tj, tm
    return best_ti, best_tj


# ----------------------------------------------------------------------------
# Kernel
# ----------------------------------------------------------------------------

def _mp_kernel(xp_ref, xi_ref, xj_ref, adj_ref,
               wcat_ref, be_ref, w2_ref, b2_ref,
               newx_ref, adjp_ref):
    i = pl.program_id(2)                      # source (i) chunk index; reduction axis
    _, ti, tj, fe1 = adj_ref.shape
    h = newx_ref.shape[2]

    # Initialise the resident new_x accumulator with the residual x-projection.
    @pl.when(i == 0)
    def _():
        newx_ref[0] = xp_ref[0]

    # One fused MXU matmul over the mask-augmented edge features:
    #   lanes [0 , H)  -> edge projection  adj @ W_e
    #   lanes [H ,2H)  -> message term     adj @ (W_e @ W1_e)
    #   lanes [2H,3H)  -> {0,1} mask broadcast across H lanes (exact)
    adj_c = adj_ref[0].reshape(ti * tj, fe1)      # leading-axis merge (tj % 8 == 0)
    proj = jnp.dot(adj_c, wcat_ref[...], preferred_element_type=jnp.float32)

    adjp = proj[:, 0:h] + be_ref[...]
    adjp_ref[0] = adjp.reshape(ti, tj, h).astype(adjp_ref.dtype)

    e = proj[:, h:2 * h].reshape(ti, tj, h)
    maskb = proj[:, 2 * h:3 * h]                  # (TI*TJ, H)

    # message_proj1 (b1 and b_edge@W1_e folded into the xi term), relu, proj2.
    pre = e + xi_ref[0][:, None, :] + xj_ref[0][None, :, :]       # (ti, tj, h)
    act = jnp.maximum(pre, 0.0).reshape(ti * tj, h)
    msg = jnp.dot(act.astype(w2_ref.dtype), w2_ref[...],
                  preferred_element_type=jnp.float32) + b2_ref[...]
    # relu(m * mask) == relu(m) * mask for a {0,1} mask.
    msg = jnp.maximum(msg, 0.0) * maskb

    # Neighbour aggregation ('sum' over the TI source rows of this chunk).
    newx_ref[0] = newx_ref[0] + jnp.sum(msg.reshape(ti, tj, h), axis=0)


# ----------------------------------------------------------------------------
# Wrapper
# ----------------------------------------------------------------------------

def message_passing_mpnn(x, adj, adj_mask, params, *,
                         compute_dtype=jnp.float32, adjp_dtype=None):
    """Returns (new_x, adj_projected, adj_mask), matching the PyTorch forward."""
    B, N, _ = x.shape
    Fe = adj.shape[-1]
    H = params["w_node"].shape[1]
    f32 = jnp.float32
    cdt = jnp.dtype(compute_dtype)
    odt = jnp.dtype(adjp_dtype) if adjp_dtype is not None else cdt

    # ---- hoisted precompute (tiny, full-MXU-height XLA matmuls) ------------
    xp = x.astype(f32) @ params["w_node"].astype(f32)                 # (B,N,H)
    xi_b = (xp @ params["w1_i"] + params["b1"]
            + params["b_edge"] @ params["w1_e"]).astype(f32)          # biases folded
    xj = (xp @ params["w1_j"]).astype(f32)
    we1e = params["w_edge"] @ params["w1_e"]                          # (Fe, H)

    # Fused edge weight (Fe+1, 3H): [W_e | W_e@W1_e | 0] plus a mask-selector
    # row [0 | 0 | 1], so a single K=Fe+1 matmul produces the edge projection,
    # the e message term and the mask broadcast with one lane-dense push.
    w_cat = jnp.concatenate([
        jnp.concatenate([params["w_edge"], we1e,
                         jnp.zeros((Fe, H), f32)], axis=1),
        jnp.concatenate([jnp.zeros((1, 2 * H), f32),
                         jnp.ones((1, H), f32)], axis=1),
    ], axis=0).astype(cdt)                                            # (Fe+1,3H)
    w2 = params["w2"].astype(cdt)
    be = params["b_edge"].astype(f32)
    b2 = params["b2"].astype(f32)

    # Mask folded into adj as an extra channel: drops a separate DMA stream
    # and its lane-padded VMEM buffers.
    adj_aug = jnp.concatenate([adj, adj_mask], axis=-1).astype(cdt)   # (B,N,N,Fe+1)

    # ---- pad node dim to a multiple of 8 (layout-free in-kernel reshapes) --
    Np = -(-N // 8) * 8
    if Np != N:
        p = Np - N
        xp = jnp.pad(xp, ((0, 0), (0, p), (0, 0)))
        xi_b = jnp.pad(xi_b, ((0, 0), (0, p), (0, 0)))
        xj = jnp.pad(xj, ((0, 0), (0, p), (0, 0)))
        adj_aug = jnp.pad(adj_aug, ((0, 0), (0, p), (0, p), (0, 0)))  # mask pad = 0

    # ---- generation-aware tile / VMEM sizing --------------------------------
    vmem_cap = _vmem_capacity_bytes()                 # ~64 MiB v7x, 128 MiB v5e/v6e
    vmem_limit = int(min(max(0.70 * vmem_cap, 32 * 1024 * 1024),
                         100 * 1024 * 1024))
    TI, TJ = _choose_tiles(Np, B, Fe + 1, H, cdt.itemsize, odt.itemsize,
                           budget_bytes=int(0.80 * vmem_limit))
    # TODO(synk): H=32 keeps matmul N and output stores lane-sparse (32/128);
    # padding hidden_dim to 128 at the model level is the next structural lever.

    grid = (B, Np // TJ, Np // TI)    # (batch, target j-tiles, source i-tiles)

    def fixed(shape):
        return pl.BlockSpec(shape, lambda b, j, i: (0,) * len(shape))

    in_specs = [
        pl.BlockSpec((1, TJ, H), lambda b, j, i: (b, j, 0)),              # xp (residual)
        pl.BlockSpec((1, TI, H), lambda b, j, i: (b, i, 0)),              # xi (+ folded biases)
        pl.BlockSpec((1, TJ, H), lambda b, j, i: (b, j, 0)),              # xj
        pl.BlockSpec((1, TI, TJ, Fe + 1), lambda b, j, i: (b, i, j, 0)),  # adj + mask
        fixed((Fe + 1, 3 * H)),   # fused edge weight
        fixed((1, H)),            # b_edge
        fixed((H, H)),            # w2
        fixed((1, H)),            # b2
    ]
    out_specs = [
        pl.BlockSpec((1, TJ, H), lambda b, j, i: (b, j, 0)),              # new_x accumulator
        pl.BlockSpec((1, TI, TJ, H), lambda b, j, i: (b, i, j, 0)),       # projected adj
    ]
    out_shape = [
        jax.ShapeDtypeStruct((B, Np, H), f32),
        jax.ShapeDtypeStruct((B, Np, Np, H), odt),
    ]

    flops = 2 * B * Np * Np * (3 * H * (Fe + 1) + H * H)
    bytes_accessed = (B * Np * Np * ((Fe + 1) * cdt.itemsize + H * odt.itemsize)
                      + 4 * B * Np * H * 4)
    cost = pl.CostEstimate(flops=int(flops), transcendentals=0,
                           bytes_accessed=int(bytes_accessed))

    new_x, adjp = pl.pallas_call(
        _mp_kernel,
        grid=grid,
        in_specs=in_specs,
        out_specs=out_specs,
        out_shape=out_shape,
        compiler_params=pltpu.CompilerParams(
            dimension_semantics=("parallel", "parallel", "arbitrary"),
            vmem_limit_bytes=vmem_limit),
        cost_estimate=cost,
    )(xp, xi_b, xj, adj_aug, w_cat, be, w2, b2)

    if Np != N:
        new_x = new_x[:, :N]
        adjp = adjp[:, :N, :N]
    return new_x, adjp, adj_mask


# ----------------------------------------------------------------------------
# Pure-JAX reference + demo
# ----------------------------------------------------------------------------

def reference(x, adj, adj_mask, p):
    """Pure-JAX replica of the PyTorch forward (mpnn / depth=2 / sum)."""
    xp = x @ p["w_node"]
    adjp = adj @ p["w_edge"] + p["b_edge"][0]
    B, N, H = xp.shape
    x_i = jnp.broadcast_to(xp[:, :, None, :], (B, N, N, H))
    x_j = jnp.broadcast_to(xp[:, None, :, :], (B, N, N, H))
    cat = jnp.concatenate([x_i, x_j, adjp], axis=-1)
    w1 = jnp.concatenate([p["w1_i"], p["w1_j"], p["w1_e"]], axis=0)
    m = jnp.maximum(cat @ w1 + p["b1"][0], 0.0)
    m = m @ p["w2"] + p["b2"][0]
    m = jnp.maximum(m * adj_mask, 0.0)
    neighb = jnp.sum(m, axis=1)   # torch.sum(messages, dim=-3)
    return neighb + xp, adjp, adj_mask


if __name__ == "__main__":
    B, N, Fn, Fe, H = 2, 8, 4, 6, 32
    key = jax.random.PRNGKey(0)
    ks = jax.random.split(key, 12)

    def lin(k, fan_in, shape):
        bound = 1.0 / float(fan_in) ** 0.5
        return jax.random.uniform(k, shape, jnp.float32, -bound, bound)

    # Deterministic synthetic parameters (PyTorch-Linear-style uniform init).
    params = {
        "w_node": lin(ks[0], Fn, (Fn, H)),      # node_proj (no bias)
        "w_edge": lin(ks[1], Fe, (Fe, H)),      # edge_proj
        "b_edge": lin(ks[2], Fe, (1, H)),
        "w1_i":   lin(ks[3], 3 * H, (H, H)),    # message_proj1 split over cat order
        "w1_j":   lin(ks[4], 3 * H, (H, H)),
        "w1_e":   lin(ks[5], 3 * H, (H, H)),
        "b1":     lin(ks[6], 3 * H, (1, H)),
        "w2":     lin(ks[7], H, (H, H)),        # message_proj2 (depth == 2)
        "b2":     lin(ks[8], H, (1, H)),
    }

    x = jax.random.normal(ks[9], (B, N, Fn), jnp.float32)
    adj = jax.random.normal(ks[10], (B, N, N, Fe), jnp.float32)
    adj_mask = (jax.random.uniform(ks[11], (B, N, N, 1)) > 0.3).astype(jnp.float32)

    ref_x, ref_adj, _ = reference(x, adj, adj_mask, params)

    # f32 run (tight check)
    new_x, adj_p, mask_out = jax.block_until_ready(
        message_passing_mpnn(x, adj, adj_mask, params))
    assert jnp.allclose(new_x, ref_x, atol=2e-4, rtol=2e-4)
    assert jnp.allclose(adj_p, ref_adj, atol=2e-4, rtol=2e-4)
    assert mask_out.shape == adj_mask.shape

    # bf16 streaming run (halves adj read and adjp write; accumulation stays f32)
    new_x_bf, adj_p_bf, _ = jax.block_until_ready(
        message_passing_mpnn(x, adj, adj_mask, params,
                             compute_dtype=jnp.bfloat16))
    assert jnp.allclose(new_x_bf, ref_x, atol=5e-2, rtol=5e-2)
    assert jnp.allclose(adj_p_bf.astype(jnp.float32), ref_adj, atol=5e-2, rtol=5e-2)

    print("KERNEL_OK")
</pallas_src>

<mosaic_0001>
module attributes {stable_mosaic.version = 11 : i64} {
  func.func @_mp_kernel(%arg0: i32, %arg1: i32, %arg2: i32, %arg3: memref<1x8x32xf32, #tpu.memory_space<vmem>>, %arg4: memref<1x8x32xf32, #tpu.memory_space<vmem>>, %arg5: memref<1x8x32xf32, #tpu.memory_space<vmem>>, %arg6: memref<1x8x8x7xf32, #tpu.memory_space<vmem>>, %arg7: memref<7x96xf32, #tpu.memory_space<vmem>>, %arg8: memref<1x32xf32, #tpu.memory_space<vmem>>, %arg9: memref<32x32xf32, #tpu.memory_space<vmem>>, %arg10: memref<1x32xf32, #tpu.memory_space<vmem>>, %arg11: memref<1x8x32xf32, #tpu.memory_space<vmem>>, %arg12: memref<1x8x8x32xf32, #tpu.memory_space<vmem>>) attributes {dimension_semantics = [#tpu.dimension_semantics<parallel>, #tpu.dimension_semantics<parallel>, #tpu.dimension_semantics<arbitrary>], iteration_bounds = array<i64: 2, 1, 1>, scalar_prefetch = 0 : i64, scratch_operands = 0 : i64, tpu.core_type = #tpu.core_type<tc>, window_params = [{transform_indices = @transform_0, window_bounds = array<i64: 1, 8, 32>}, {transform_indices = @transform_1, window_bounds = array<i64: 1, 8, 32>}, {transform_indices = @transform_2, window_bounds = array<i64: 1, 8, 32>}, {transform_indices = @transform_3, window_bounds = array<i64: 1, 8, 8, 7>}, {pipeline_mode = #tpu.pipeline_mode<synchronous>, transform_indices = @transform_4, window_bounds = array<i64: 7, 96>}, {pipeline_mode = #tpu.pipeline_mode<synchronous>, transform_indices = @transform_5, window_bounds = array<i64: 1, 32>}, {pipeline_mode = #tpu.pipeline_mode<synchronous>, transform_indices = @transform_6, window_bounds = array<i64: 32, 32>}, {pipeline_mode = #tpu.pipeline_mode<synchronous>, transform_indices = @transform_7, window_bounds = array<i64: 1, 32>}, {transform_indices = @transform_8, window_bounds = array<i64: 1, 8, 32>}, {transform_indices = @transform_9, window_bounds = array<i64: 1, 8, 8, 32>}]} {
    %c0_i32 = arith.constant 0 : i32
    %0 = arith.cmpi eq, %arg2, %c0_i32 : i32
    %1 = arith.extui %0 : i1 to i32
    %c0_i32_0 = arith.constant 0 : i32
    %2 = arith.cmpi ne, %1, %c0_i32_0 : i32
    scf.if %2 {
      %c0_32 = arith.constant 0 : index
      %c0_33 = arith.constant 0 : index
      %c0_34 = arith.constant 0 : index
      %48 = vector.load %arg3[%c0_32, %c0_33, %c0_34] : memref<1x8x32xf32, #tpu.memory_space<vmem>>, vector<1x8x32xf32>
      %49 = vector.shape_cast %48 : vector<1x8x32xf32> to vector<8x32xf32>
      %c0_35 = arith.constant 0 : index
      %c0_36 = arith.constant 0 : index
      %c0_37 = arith.constant 0 : index
      %50 = vector.load %arg11[%c0_35, %c0_36, %c0_37] : memref<1x8x32xf32, #tpu.memory_space<vmem>>, vector<1x8x32xf32>
      %51 = vector.shape_cast %50 : vector<1x8x32xf32> to vector<8x32xf32>
      %52 = vector.shape_cast %49 : vector<8x32xf32> to vector<1x8x32xf32>
      tpu.vector_store %arg11[%c0_35, %c0_36, %c0_37], %52 {strides = array<i32>} : memref<1x8x32xf32, #tpu.memory_space<vmem>>, vector<1x8x32xf32>,
    } else {
    }
    %c0 = arith.constant 0 : index
    %c0_1 = arith.constant 0 : index
    %c0_2 = arith.constant 0 : index
    %c0_3 = arith.constant 0 : index
    %3 = vector.load %arg6[%c0, %c0_1, %c0_2, %c0_3] : memref<1x8x8x7xf32, #tpu.memory_space<vmem>>, vector<1x8x8x7xf32>
    %4 = vector.shape_cast %3 : vector<1x8x8x7xf32> to vector<8x8x7xf32>
    %5 = vector.shape_cast %4 : vector<8x8x7xf32> to vector<64x7xf32>
    %c0_4 = arith.constant 0 : index
    %c0_5 = arith.constant 0 : index
    %6 = vector.load %arg7[%c0_4, %c0_5] : memref<7x96xf32, #tpu.memory_space<vmem>>, vector<7x96xf32>
    %cst = arith.constant dense<0.000000e+00> : vector<64x96xf32>
    %7 = tpu.matmul %5, %6, %cst {dimension_numbers = #tpu.dot_dimension_numbers<[1], [0], [0], [1], [0, 0, 1, 1], [], []>} : vector<64x7xf32>, vector<7x96xf32>, vector<64x96xf32> -> vector<64x96xf32>
    %8 = vector.extract_strided_slice %7 {offsets = [0, 0], sizes = [64, 32], strides = [1, 1]} : vector<64x96xf32> to vector<64x32xf32>
    %c0_6 = arith.constant 0 : index
    %c0_7 = arith.constant 0 : index
    %9 = vector.load %arg8[%c0_6, %c0_7] : memref<1x32xf32, #tpu.memory_space<vmem>>, vector<1x32xf32>
    %10 = vector.broadcast %9 : vector<1x32xf32> to vector<64x32xf32>
    %11 = arith.addf %8, %10 : vector<64x32xf32>
    %12 = vector.shape_cast %11 : vector<64x32xf32> to vector<8x8x32xf32>
    %c0_8 = arith.constant 0 : index
    %c0_9 = arith.constant 0 : index
    %c0_10 = arith.constant 0 : index
    %c0_11 = arith.constant 0 : index
    %13 = vector.load %arg12[%c0_8, %c0_9, %c0_10, %c0_11] : memref<1x8x8x32xf32, #tpu.memory_space<vmem>>, vector<1x8x8x32xf32>
    %14 = vector.shape_cast %13 : vector<1x8x8x32xf32> to vector<8x8x32xf32>
    %15 = vector.shape_cast %12 : vector<8x8x32xf32> to vector<1x8x8x32xf32>
    tpu.vector_store %arg12[%c0_8, %c0_9, %c0_10, %c0_11], %15 {strides = array<i32>} : memref<1x8x8x32xf32, #tpu.memory_space<vmem>>, vector<1x8x8x32xf32>,
    %16 = vector.extract_strided_slice %7 {offsets = [0, 32], sizes = [64, 32], strides = [1, 1]} : vector<64x96xf32> to vector<64x32xf32>
    %17 = vector.shape_cast %16 : vector<64x32xf32> to vector<8x8x32xf32>
    %18 = vector.extract_strided_slice %7 {offsets = [0, 64], sizes = [64, 32], strides = [1, 1]} : vector<64x96xf32> to vector<64x32xf32>
    %c0_12 = arith.constant 0 : index
    %c0_13 = arith.constant 0 : index
    %c0_14 = arith.constant 0 : index
    %19 = vector.load %arg4[%c0_12, %c0_13, %c0_14] : memref<1x8x32xf32, #tpu.memory_space<vmem>>, vector<1x8x32xf32>
    %20 = vector.shape_cast %19 : vector<1x8x32xf32> to vector<8x32xf32>
    %21 = vector.shape_cast %20 : vector<8x32xf32> to vector<8x1x32xf32>
    %22 = vector.broadcast %21 : vector<8x1x32xf32> to vector<8x8x32xf32>
    %23 = arith.addf %17, %22 : vector<8x8x32xf32>
    %c0_15 = arith.constant 0 : index
    %c0_16 = arith.constant 0 : index
    %c0_17 = arith.constant 0 : index
    %24 = vector.load %arg5[%c0_15, %c0_16, %c0_17] : memref<1x8x32xf32, #tpu.memory_space<vmem>>, vector<1x8x32xf32>
    %25 = vector.shape_cast %24 : vector<1x8x32xf32> to vector<8x32xf32>
    %26 = vector.shape_cast %25 : vector<8x32xf32> to vector<1x8x32xf32>
    %27 = vector.broadcast %26 : vector<1x8x32xf32> to vector<8x8x32xf32>
    %28 = arith.addf %23, %27 : vector<8x8x32xf32>
    %cst_18 = arith.constant 0.000000e+00 : f32
    %29 = vector.broadcast %cst_18 : f32 to vector<8x8x32xf32>
    %30 = arith.maximumf %28, %29 : vector<8x8x32xf32>
    %31 = vector.shape_cast %30 : vector<8x8x32xf32> to vector<64x32xf32>
    %c0_19 = arith.constant 0 : index
    %c0_20 = arith.constant 0 : index
    %32 = vector.load %arg9[%c0_19, %c0_20] : memref<32x32xf32, #tpu.memory_space<vmem>>, vector<32x32xf32>
    %cst_21 = arith.constant dense<0.000000e+00> : vector<64x32xf32>
    %33 = tpu.matmul %31, %32, %cst_21 {dimension_numbers = #tpu.dot_dimension_numbers<[1], [0], [0], [1], [0, 0, 1, 1], [], []>} : vector<64x32xf32>, vector<32x32xf32>, vector<64x32xf32> -> vector<64x32xf32>
    %c0_22 = arith.constant 0 : index
    %c0_23 = arith.constant 0 : index
    %34 = vector.load %arg10[%c0_22, %c0_23] : memref<1x32xf32, #tpu.memory_space<vmem>>, vector<1x32xf32>
    %35 = vector.broadcast %34 : vector<1x32xf32> to vector<64x32xf32>
    %36 = arith.addf %33, %35 : vector<64x32xf32>
    %cst_24 = arith.constant 0.000000e+00 : f32
    %37 = vector.broadcast %cst_24 : f32 to vector<64x32xf32>
    %38 = arith.maximumf %36, %37 : vector<64x32xf32>
    %39 = arith.mulf %38, %18 : vector<64x32xf32>
    %c0_25 = arith.constant 0 : index
    %c0_26 = arith.constant 0 : index
    %c0_27 = arith.constant 0 : index
    %40 = vector.load %arg11[%c0_25, %c0_26, %c0_27] : memref<1x8x32xf32, #tpu.memory_space<vmem>>, vector<1x8x32xf32>
    %41 = vector.shape_cast %40 : vector<1x8x32xf32> to vector<8x32xf32>
    %42 = vector.shape_cast %39 : vector<64x32xf32> to vector<8x8x32xf32>
    %cst_28 = arith.constant dense<0.000000e+00> : vector<8x32xf32>
    %43 = vector.multi_reduction <add>, %42, %cst_28 [0] : vector<8x8x32xf32> to vector<8x32xf32>
    %44 = arith.addf %41, %43 : vector<8x32xf32>
    %c0_29 = arith.constant 0 : index
    %c0_30 = arith.constant 0 : index
    %c0_31 = arith.constant 0 : index
    %45 = vector.load %arg11[%c0_29, %c0_30, %c0_31] : memref<1x8x32xf32, #tpu.memory_space<vmem>>, vector<1x8x32xf32>
    %46 = vector.shape_cast %45 : vector<1x8x32xf32> to vector<8x32xf32>
    %47 = vector.shape_cast %44 : vector<8x32xf32> to vector<1x8x32xf32>
    tpu.vector_store %arg11[%c0_29, %c0_30, %c0_31], %47 {strides = array<i32>} : memref<1x8x32xf32, #tpu.memory_space<vmem>>, vector<1x8x32xf32>,
    return
  }
  func.func @transform_0(%arg0: i32, %arg1: i32, %arg2: i32) -> (i32, i32, i32) {
    %c0_i32 = arith.constant 0 : i32
    %c0_i32_0 = arith.constant 0 : i32
    return %arg0, %arg1, %c0_i32 : i32, i32, i32
  }
  func.func @transform_1(%arg0: i32, %arg1: i32, %arg2: i32) -> (i32, i32, i32) {
    %c0_i32 = arith.constant 0 : i32
    %c0_i32_0 = arith.constant 0 : i32
    return %arg0, %arg2, %c0_i32 : i32, i32, i32
  }
  func.func @transform_2(%arg0: i32, %arg1: i32, %arg2: i32) -> (i32, i32, i32) {
    %c0_i32 = arith.constant 0 : i32
    %c0_i32_0 = arith.constant 0 : i32
    return %arg0, %arg1, %c0_i32 : i32, i32, i32
  }
  func.func @transform_3(%arg0: i32, %arg1: i32, %arg2: i32) -> (i32, i32, i32, i32) {
    %c0_i32 = arith.constant 0 : i32
    %c0_i32_0 = arith.constant 0 : i32
    return %arg0, %arg2, %arg1, %c0_i32 : i32, i32, i32, i32
  }
  func.func @transform_4(%arg0: i32, %arg1: i32, %arg2: i32) -> (i32, i32) {
    %c0_i32 = arith.constant 0 : i32
    %c0_i32_0 = arith.constant 0 : i32
    %c0_i32_1 = arith.constant 0 : i32
    return %c0_i32, %c0_i32_0 : i32, i32
  }
  func.func @transform_5(%arg0: i32, %arg1: i32, %arg2: i32) -> (i32, i32) {
    %c0_i32 = arith.constant 0 : i32
    %c0_i32_0 = arith.constant 0 : i32
    %c0_i32_1 = arith.constant 0 : i32
    return %c0_i32, %c0_i32_0 : i32, i32
  }
  func.func @transform_6(%arg0: i32, %arg1: i32, %arg2: i32) -> (i32, i32) {
    %c0_i32 = arith.constant 0 : i32
    %c0_i32_0 = arith.constant 0 : i32
    %c0_i32_1 = arith.constant 0 : i32
    return %c0_i32, %c0_i32_0 : i32, i32
  }
  func.func @transform_7(%arg0: i32, %arg1: i32, %arg2: i32) -> (i32, i32) {
    %c0_i32 = arith.constant 0 : i32
    %c0_i32_0 = arith.constant 0 : i32
    %c0_i32_1 = arith.constant 0 : i32
    return %c0_i32, %c0_i32_0 : i32, i32
  }
  func.func @transform_8(%arg0: i32, %arg1: i32, %arg2: i32) -> (i32, i32, i32) {
    %c0_i32 = arith.constant 0 : i32
    %c0_i32_0 = arith.constant 0 : i32
    return %arg0, %arg1, %c0_i32 : i32, i32, i32
  }
  func.func @transform_9(%arg0: i32, %arg1: i32, %arg2: i32) -> (i32, i32, i32, i32) {
    %c0_i32 = arith.constant 0 : i32
    %c0_i32_0 = arith.constant 0 : i32
    return %arg0, %arg2, %arg1, %c0_i32 : i32, i32, i32, i32
  }
}

</mosaic_0001>

<llo_original>
// kernel: tpu_custom_call.1
$region0: #{tpu_custom_call.1}
  #allocation0 [shape = 'u32[]', space=smem, size = 0x4, offset = 0x4, fixed_abs, tag = 'smem constant byte address 0x4 - core index']
  #allocation1 [shape = 'u32[144,128]{1,0:T(1,128)}', space=vmem, size = 0x12000, scoped, tag = 'internal scratch']
  %s0 = inlined_call_operand.vmem [shape: f32[2,8,32], index: 0, kind: input, shape index: {}]
  %s1 = inlined_call_operand.vmem [shape: f32[2,8,32], index: 1, kind: input, shape index: {}]
  %s2 = inlined_call_operand.vmem [shape: f32[2,8,32], index: 2, kind: input, shape index: {}]
  %s3 = inlined_call_operand.vmem [shape: f32[2,8,8,7], index: 3, kind: input, shape index: {}]
  %s4 = inlined_call_operand.vmem [shape: f32[7,96], index: 4, kind: input, shape index: {}]
  %s5 = inlined_call_operand.vmem [shape: f32[1,32], index: 5, kind: input, shape index: {}]
  %s6 = inlined_call_operand.vmem [shape: f32[32,32], index: 6, kind: input, shape index: {}]
  %s7 = inlined_call_operand.vmem [shape: f32[1,32], index: 7, kind: input, shape index: {}]
  %s8 = inlined_call_operand.hbm [shape: f32[2,8,32], index: 8, kind: output, shape index: {0}]
  %s9 = inlined_call_operand.hbm [shape: f32[2,8,8,32], index: 9, kind: output, shape index: {1}]
  %10 = xla_tuple %s8, %s9
  %s11 = sld [smem:[#allocation0]]
  $region77: #{tpu_custom_call.1} parent=0
    _
  %s13 = ssub.s32 1, %s11
  %s14 = scalar_select 0, %s13, %s11
  $region1: #{tpu_custom_call.1} parent=0
    #allocation2 [shape = 'u8[8192]{0}', space=vmem, size = 0x2000, scoped, tag = 'output window, operand 0']
    #allocation3 [shape = 's32[2]{0}', space=sflag, size = 0x8, scoped, tag = 'scoped memory for tpu_custom_call.1']
    #allocation4 [shape = 'u8[65536]{0}', space=vmem, size = 0x10000, scoped, tag = 'output window, operand 1']
    #allocation5 [shape = 's32[2]{0}', space=sflag, size = 0x8, scoped, tag = 'scoped memory for tpu_custom_call.1']
    %15 = vsyncpa [#allocation3], 0
    %s16 = scalar_lea.sflag [#allocation3], 1
    %17 = vsyncpa %s16, 0
    %18 = vsyncpa [#allocation5], 0
    %s19 = scalar_lea.sflag [#allocation5], 1
    %20 = vsyncpa %s19, 0
    loop: start=0, step=1, limit=4
    $region2: #{tpu_custom_call.1} parent=1 // loop_pre_header
      _
    $region3: #{tpu_custom_call.1} parent=1 // loop_header
      %s22 = sphi 0, %s26
      %p23 = scmp.ge.s32.totalorder %s22, 4
      %s29 = sphi 0, %s48
      %s30 = sphi 0, %s44
      %s31 = sphi 0, %s40
      %s32 = sphi 0, %s29
      %s33 = sphi 0, %s30
      %s34 = sphi 0, %s31
      %s35 = sphi 0, %s32
      %s36 = sphi 0, %s33
      %s37 = sphi 0, %s34
      %s53 = sphi 0, %s55
      %s56 = sphi 0, %s53
      %s57 = sphi 0, %s56
      %s73 = sphi 0, %s57
      %s81 = sphi 0, %s83
      %s84 = sphi 0, %s81
      %s85 = sphi 0, %s84
      %s101 = sphi 0, %s85
      %s109 = sphi 0, %s111
      %s112 = sphi 0, %s109
      %s113 = sphi 0, %s112
      %s129 = sphi 0, %s113
      %s139 = sphi 0, %s141
      %s142 = sphi 0, %s139
      %s143 = sphi 0, %s142
      %s159 = sphi 0, %s143
      %s163 = sphi 0, %s163
      %s165 = sphi 0, %s163
      %s166 = sphi 0, %s165
      %s180 = sphi 0, %s166
      %s184 = sphi 0, %s184
      %s186 = sphi 0, %s184
      %s187 = sphi 0, %s186
      %s201 = sphi 0, %s187
      %s205 = sphi 0, %s205
      %s207 = sphi 0, %s205
      %s208 = sphi 0, %s207
      %s222 = sphi 0, %s208
      %s226 = sphi 0, %s226
      %s228 = sphi 0, %s226
      %s229 = sphi 0, %s228
      %s243 = sphi 0, %s229
      %s251 = sphi 0, %s253
      %s254 = sphi 0, %s251
      %s255 = sphi 0, %s254
      %s271 = sphi 0, %s255
      %s281 = sphi 0, %s283
      %s284 = sphi 0, %s281
      %s285 = sphi 0, %s284
      %s301 = sphi 0, %s285
    $region4: #{tpu_custom_call.1} parent=1 // loop_header_branch
      %25 = sbr.rel (%p23) target = $region8
    $region5: #{tpu_custom_call.1} parent=1 // loop_body
      %s27 = ssub.s32 %s22, 1
      %s28 = ssub.s32 %s22, 2
      %s38 = sadd.s32 1, %s31
      %p39 = scmp.ge.s32.totalorder %s38, 1
      %s40 = scalar_select %p39, 0, %s38
      %s41 = sadd.s32 1, %s30
      %s42 = scalar_select %p39, %s41, %s30
      %p43 = scmp.ge.s32.totalorder %s42, 1
      %s44 = scalar_select %p43, 0, %s42
      %s45 = sadd.s32 1, %s29
      %s46 = scalar_select %p43, %s45, %s29
      %p47 = scmp.ge.s32.totalorder %s46, 2
      %s48 = scalar_select %p47, 0, %s46
      %s49 = ssub.s32 %s29, %s48
      %s50 = ssub.s32 %s30, %s44
      %s51 = sor.u32 %s49, %s50
      %p52 = scmp.eq.s32.totalorder %s51, 0
      %s54 = sadd.s32 %s53, 1
      %s55 = scalar_select %p52, %s53, %s54
      %p58 = pneg %p52
      %p59 = scmp.eq.s32.totalorder %s22, 1
      %p60 = por %p58, %p59
      %p61 = scmp.ne.s32.totalorder %s53, %s56
      %p62 = scmp.eq.s32.totalorder %s22, 0
      %p63 = por %p61, %p62
      %p64 = scmp.ne.s32.totalorder %s53, %s56
      %p65 = scmp.eq.s32.totalorder %s27, 1
      %p66 = por %p64, %p65
      %p67 = scmp.ne.s32.totalorder %s56, %s57
      %p68 = scmp.eq.s32.totalorder %s27, 0
      %p69 = por %p67, %p68
      %p70 = scmp.ne.s32.totalorder %s56, %s57
      %p71 = scmp.eq.s32.totalorder %s28, 1
      %p72 = por %p70, %p71
      %p74 = scmp.ne.s32.totalorder %s57, %s73
      %p75 = scmp.eq.s32.totalorder %s28, 0
      %p76 = por %p74, %p75
      %s77 = ssub.s32 %s29, %s48
      %s78 = ssub.s32 %s31, %s40
      %s79 = sor.u32 %s77, %s78
      %p80 = scmp.eq.s32.totalorder %s79, 0
      %s82 = sadd.s32 %s81, 1
      %s83 = scalar_select %p80, %s81, %s82
      %p86 = pneg %p80
      %p87 = scmp.eq.s32.totalorder %s22, 1
      %p88 = por %p86, %p87
      %p89 = scmp.ne.s32.totalorder %s81, %s84
      %p90 = scmp.eq.s32.totalorder %s22, 0
      %p91 = por %p89, %p90
      %p92 = scmp.ne.s32.totalorder %s81, %s84
      %p93 = scmp.eq.s32.totalorder %s27, 1
      %p94 = por %p92, %p93
      %p95 = scmp.ne.s32.totalorder %s84, %s85
      %p96 = scmp.eq.s32.totalorder %s27, 0
      %p97 = por %p95, %p96
      %p98 = scmp.ne.s32.totalorder %s84, %s85
      %p99 = scmp.eq.s32.totalorder %s28, 1
      %p100 = por %p98, %p99
      %p102 = scmp.ne.s32.totalorder %s85, %s101
      %p103 = scmp.eq.s32.totalorder %s28, 0
      %p104 = por %p102, %p103
      %s105 = ssub.s32 %s29, %s48
      %s106 = ssub.s32 %s30, %s44
      %s107 = sor.u32 %s105, %s106
      %p108 = scmp.eq.s32.totalorder %s107, 0
      %s110 = sadd.s32 %s109, 1
      %s111 = scalar_select %p108, %s109, %s110
      %p114 = pneg %p108
      %p115 = scmp.eq.s32.totalorder %s22, 1
      %p116 = por %p114, %p115
      %p117 = scmp.ne.s32.totalorder %s109, %s112
      %p118 = scmp.eq.s32.totalorder %s22, 0
      %p119 = por %p117, %p118
      %p120 = scmp.ne.s32.totalorder %s109, %s112
      %p121 = scmp.eq.s32.totalorder %s27, 1
      %p122 = por %p120, %p121
      %p123 = scmp.ne.s32.totalorder %s112, %s113
      %p124 = scmp.eq.s32.totalorder %s27, 0
      %p125 = por %p123, %p124
      %p126 = scmp.ne.s32.totalorder %s112, %s113
      %p127 = scmp.eq.s32.totalorder %s28, 1
      %p128 = por %p126, %p127
      %p130 = scmp.ne.s32.totalorder %s113, %s129
      %p131 = scmp.eq.s32.totalorder %s28, 0
      %p132 = por %p130, %p131
      %s133 = ssub.s32 %s29, %s48
      %s134 = ssub.s32 %s31, %s40
      %s135 = sor.u32 %s133, %s134
      %s136 = ssub.s32 %s30, %s44
      %s137 = sor.u32 %s135, %s136
      %p138 = scmp.eq.s32.totalorder %s137, 0
      %s140 = sadd.s32 %s139, 1
      %s141 = scalar_select %p138, %s139, %s140
      %p144 = pneg %p138
      %p145 = scmp.eq.s32.totalorder %s22, 1
      %p146 = por %p144, %p145
      %p147 = scmp.ne.s32.totalorder %s139, %s142
      %p148 = scmp.eq.s32.totalorder %s22, 0
      %p149 = por %p147, %p148
      %p150 = scmp.ne.s32.totalorder %s139, %s142
      %p151 = scmp.eq.s32.totalorder %s27, 1
      %p152 = por %p150, %p151
      %p153 = scmp.ne.s32.totalorder %s142, %s143
      %p154 = scmp.eq.s32.totalorder %s27, 0
      %p155 = por %p153, %p154
      %p156 = scmp.ne.s32.totalorder %s142, %s143
      %p157 = scmp.eq.s32.totalorder %s28, 1
      %p158 = por %p156, %p157
      %p160 = scmp.ne.s32.totalorder %s143, %s159
      %p161 = scmp.eq.s32.totalorder %s28, 0
      %p162 = por %p160, %p161
      %s164 = sadd.s32 %s163, 1
      %p167 = scmp.eq.s32.totalorder %s22, 1
      %p168 = scmp.ne.s32.totalorder %s163, %s165
      %p169 = scmp.eq.s32.totalorder %s22, 0
      %p170 = por %p168, %p169
      %p171 = scmp.ne.s32.totalorder %s163, %s165
      %p172 = scmp.eq.s32.totalorder %s27, 1
      %p173 = por %p171, %p172
      %p174 = scmp.ne.s32.totalorder %s165, %s166
      %p175 = scmp.eq.s32.totalorder %s27, 0
      %p176 = por %p174, %p175
      %p177 = scmp.ne.s32.totalorder %s165, %s166
      %p178 = scmp.eq.s32.totalorder %s28, 1
      %p179 = por %p177, %p178
      %p181 = scmp.ne.s32.totalorder %s166, %s180
      %p182 = scmp.eq.s32.totalorder %s28, 0
      %p183 = por %p181, %p182
      %s185 = sadd.s32 %s184, 1
      %p188 = scmp.eq.s32.totalorder %s22, 1
      %p189 = scmp.ne.s32.totalorder %s184, %s186
      %p190 = scmp.eq.s32.totalorder %s22, 0
      %p191 = por %p189, %p190
      %p192 = scmp.ne.s32.totalorder %s184, %s186
      %p193 = scmp.eq.s32.totalorder %s27, 1
      %p194 = por %p192, %p193
      %p195 = scmp.ne.s32.totalorder %s186, %s187
      %p196 = scmp.eq.s32.totalorder %s27, 0
      %p197 = por %p195, %p196
      %p198 = scmp.ne.s32.totalorder %s186, %s187
      %p199 = scmp.eq.s32.totalorder %s28, 1
      %p200 = por %p198, %p199
      %p202 = scmp.ne.s32.totalorder %s187, %s201
      %p203 = scmp.eq.s32.totalorder %s28, 0
      %p204 = por %p202, %p203
      %s206 = sadd.s32 %s205, 1
      %p209 = scmp.eq.s32.totalorder %s22, 1
      %p210 = scmp.ne.s32.totalorder %s205, %s207
      %p211 = scmp.eq.s32.totalorder %s22, 0
      %p212 = por %p210, %p211
      %p213 = scmp.ne.s32.totalorder %s205, %s207
      %p214 = scmp.eq.s32.totalorder %s27, 1
      %p215 = por %p213, %p214
      %p216 = scmp.ne.s32.totalorder %s207, %s208
      %p217 = scmp.eq.s32.totalorder %s27, 0
      %p218 = por %p216, %p217
      %p219 = scmp.ne.s32.totalorder %s207, %s208
      %p220 = scmp.eq.s32.totalorder %s28, 1
      %p221 = por %p219, %p220
      %p223 = scmp.ne.s32.totalorder %s208, %s222
      %p224 = scmp.eq.s32.totalorder %s28, 0
      %p225 = por %p223, %p224
      %s227 = sadd.s32 %s226, 1
      %p230 = scmp.eq.s32.totalorder %s22, 1
      %p231 = scmp.ne.s32.totalorder %s226, %s228
      %p232 = scmp.eq.s32.totalorder %s22, 0
      %p233 = por %p231, %p232
      %p234 = scmp.ne.s32.totalorder %s226, %s228
      %p235 = scmp.eq.s32.totalorder %s27, 1
      %p236 = por %p234, %p235
      %p237 = scmp.ne.s32.totalorder %s228, %s229
      %p238 = scmp.eq.s32.totalorder %s27, 0
      %p239 = por %p237, %p238
      %p240 = scmp.ne.s32.totalorder %s228, %s229
      %p241 = scmp.eq.s32.totalorder %s28, 1
      %p242 = por %p240, %p241
      %p244 = scmp.ne.s32.totalorder %s229, %s243
      %p245 = scmp.eq.s32.totalorder %s28, 0
      %p246 = por %p244, %p245
      %s247 = ssub.s32 %s29, %s48
      %s248 = ssub.s32 %s30, %s44
      %s249 = sor.u32 %s247, %s248
      %p250 = scmp.eq.s32.totalorder %s249, 0
      %s252 = sadd.s32 %s251, 1
      %s253 = scalar_select %p250, %s251, %s252
      %p256 = pneg %p250
      %p257 = scmp.eq.s32.totalorder %s22, 1
      %p258 = por %p256, %p257
      %p259 = scmp.ne.s32.totalorder %s251, %s254
      %p260 = scmp.eq.s32.totalorder %s22, 0
      %p261 = por %p259, %p260
      %p262 = scmp.ne.s32.totalorder %s251, %s254
      %p263 = scmp.eq.s32.totalorder %s27, 1
      %p264 = por %p262, %p263
      %p265 = scmp.ne.s32.totalorder %s254, %s255
      %p266 = scmp.eq.s32.totalorder %s27, 0
      %p267 = por %p265, %p266
      %p268 = scmp.ne.s32.totalorder %s254, %s255
      %p269 = scmp.eq.s32.totalorder %s28, 1
      %p270 = por %p268, %p269
      %p272 = scmp.ne.s32.totalorder %s255, %s271
      %p273 = scmp.eq.s32.totalorder %s28, 0
      %p274 = por %p272, %p273
      %s275 = ssub.s32 %s29, %s48
      %s276 = ssub.s32 %s31, %s40
      %s277 = sor.u32 %s275, %s276
      %s278 = ssub.s32 %s30, %s44
      %s279 = sor.u32 %s277, %s278
      %p280 = scmp.eq.s32.totalorder %s279, 0
      %s282 = sadd.s32 %s281, 1
      %s283 = scalar_select %p280, %s281, %s282
      %p286 = pneg %p280
      %p287 = scmp.eq.s32.totalorder %s22, 1
      %p288 = por %p286, %p287
      %p289 = scmp.ne.s32.totalorder %s281, %s284
      %p290 = scmp.eq.s32.totalorder %s22, 0
      %p291 = por %p289, %p290
      %p292 = scmp.ne.s32.totalorder %s281, %s284
      %p293 = scmp.eq.s32.totalorder %s27, 1
      %p294 = por %p292, %p293
      %p295 = scmp.ne.s32.totalorder %s284, %s285
      %p296 = scmp.eq.s32.totalorder %s27, 0
      %p297 = por %p295, %p296
      %p298 = scmp.ne.s32.totalorder %s284, %s285
      %p299 = scmp.eq.s32.totalorder %s28, 1
      %p300 = por %p298, %p299
      %p302 = scmp.ne.s32.totalorder %s285, %s301
      %p303 = scmp.eq.s32.totalorder %s28, 0
      %p304 = por %p302, %p303
      %p305 = scmp.le.s32.totalorder 1, %s22
      %p306 = scmp.lt.s32.totalorder %s22, 3
      %p307 = pnand %p305, %p306
      %p308 = pneg %p307
      // Predicated region
      $region9: #{tpu_custom_call.1} parent=5 // pred_check
        _
      $region10: #{tpu_custom_call.1} parent=5 // pred_check_branch
        %310 = sbr.rel (%p307) target = $region12
      $region11: #{tpu_custom_call.1} parent=5 // pred_region
        %s311 = ssub.s32 %s22, 1
        // Predicated region
        $region13: #{tpu_custom_call.1} parent=11 // pred_check
          %p312 = pneg %p176
        $region14: #{tpu_custom_call.1} parent=11 // pred_check_branch
          %314 = sbr.rel (%p312) target = $region16
        $region15: #{tpu_custom_call.1} parent=11 // pred_region
          _
        $region16: #{tpu_custom_call.1} parent=11 // pred_fallthru
          _
        // Predicated region
        $region17: #{tpu_custom_call.1} parent=11 // pred_check
          %p315 = pneg %p197
        $region18: #{tpu_custom_call.1} parent=11 // pred_check_branch
          %317 = sbr.rel (%p315) target = $region20
        $region19: #{tpu_custom_call.1} parent=11 // pred_region
          _
        $region20: #{tpu_custom_call.1} parent=11 // pred_fallthru
          _
        // Predicated region
        $region21: #{tpu_custom_call.1} parent=11 // pred_check
          %p318 = pneg %p218
        $region22: #{tpu_custom_call.1} parent=11 // pred_check_branch
          %320 = sbr.rel (%p318) target = $region24
        $region23: #{tpu_custom_call.1} parent=11 // pred_region
          _
        $region24: #{tpu_custom_call.1} parent=11 // pred_fallthru
          _
        // Predicated region
        $region25: #{tpu_custom_call.1} parent=11 // pred_check
          %p321 = pneg %p239
        $region26: #{tpu_custom_call.1} parent=11 // pred_check_branch
          %323 = sbr.rel (%p321) target = $region28
        $region27: #{tpu_custom_call.1} parent=11 // pred_region
          _
        $region28: #{tpu_custom_call.1} parent=11 // pred_fallthru
          _
      $region12: #{tpu_custom_call.1} parent=5 // pred_fallthru
        _
      %p324 = scmp.lt.s32.totalorder %s22, 2
      // Predicated region
      $region29: #{tpu_custom_call.1} parent=5 // pred_check
        %p325 = pneg %p324
      $region30: #{tpu_custom_call.1} parent=5 // pred_check_branch
        %327 = sbr.rel (%p325) target = $region32
      $region31: #{tpu_custom_call.1} parent=5 // pred_region
        // Predicated region
        $region33: #{tpu_custom_call.1} parent=31 // pred_check
          %p328 = pneg %p63
        $region34: #{tpu_custom_call.1} parent=31 // pred_check_branch
          %330 = sbr.rel (%p328) target = $region36
        $region35: #{tpu_custom_call.1} parent=31 // pred_region
          %p331 = scmp.lt.s32.totalorder %s29, 1
          %s332 = scalar_select %p331, %s29, 1
          %p333 = scmp.lt.s32.totalorder %s30, 0
          %s334 = scalar_select %p333, %s30, 0
          %s335 = sadd.s32 %s334, %s332
          %s336 = smul.addr %s335, 8
          %s337 = scalar_lea.vmem %s0, %s336
        $region36: #{tpu_custom_call.1} parent=31 // pred_fallthru
          _
        // Predicated region
        $region37: #{tpu_custom_call.1} parent=31 // pred_check
          %p338 = pneg %p91
        $region38: #{tpu_custom_call.1} parent=31 // pred_check_branch
          %340 = sbr.rel (%p338) target = $region40
        $region39: #{tpu_custom_call.1} parent=31 // pred_region
          %p341 = scmp.lt.s32.totalorder %s29, 1
          %s342 = scalar_select %p341, %s29, 1
          %p343 = scmp.lt.s32.totalorder %s31, 0
          %s344 = scalar_select %p343, %s31, 0
          %s345 = sadd.s32 %s344, %s342
          %s346 = smul.addr %s345, 8
          %s347 = scalar_lea.vmem %s1, %s346
        $region40: #{tpu_custom_call.1} parent=31 // pred_fallthru
          _
        // Predicated region
        $region41: #{tpu_custom_call.1} parent=31 // pred_check
          %p348 = pneg %p119
        $region42: #{tpu_custom_call.1} parent=31 // pred_check_branch
          %350 = sbr.rel (%p348) target = $region44
        $region43: #{tpu_custom_call.1} parent=31 // pred_region
          %p351 = scmp.lt.s32.totalorder %s29, 1
          %s352 = scalar_select %p351, %s29, 1
          %p353 = scmp.lt.s32.totalorder %s30, 0
          %s354 = scalar_select %p353, %s30, 0
          %s355 = sadd.s32 %s354, %s352
          %s356 = smul.addr %s355, 8
          %s357 = scalar_lea.vmem %s2, %s356
        $region44: #{tpu_custom_call.1} parent=31 // pred_fallthru
          _
        // Predicated region
        $region45: #{tpu_custom_call.1} parent=31 // pred_check
          %p358 = pneg %p149
        $region46: #{tpu_custom_call.1} parent=31 // pred_check_branch
          %360 = sbr.rel (%p358) target = $region48
        $region47: #{tpu_custom_call.1} parent=31 // pred_region
          %s361 = smul.u32 8, %s31
          %p362 = scmp.lt.s32.totalorder %s29, 1
          %s363 = scalar_select %p362, %s29, 1
          %p364 = scmp.lt.s32.totalorder %s361, 7
          %s365 = scalar_select %p364, %s361, 7
          %p366 = scmp.lt.s32.totalorder %s30, 0
          %s367 = scalar_select %p366, %s30, 0
          %s368 = sadd.s32 %s367, %s365
          %s369 = smul.addr %s363, 8
          %s370 = sadd.s32 %s368, %s369
          %s371 = smul.addr %s370, 8
          %s372 = scalar_lea.vmem %s3, %s371
          %s373 = smul.u32 8, %s31
        $region48: #{tpu_custom_call.1} parent=31 // pred_fallthru
          _
      $region32: #{tpu_custom_call.1} parent=5 // pred_fallthru
        _
      %p374 = scmp.le.s32.totalorder 1, %s22
      %p375 = scmp.lt.s32.totalorder %s22, 3
      %p376 = pnand %p374, %p375
      %p377 = pneg %p376
      // Predicated region
      $region49: #{tpu_custom_call.1} parent=5 // pred_check
        _
      $region50: #{tpu_custom_call.1} parent=5 // pred_check_branch
        %379 = sbr.rel (%p376) target = $region52
      $region51: #{tpu_custom_call.1} parent=5 // pred_region
        %s380 = ssub.s32 %s22, 1
        %p381 = scmp.lt.s32.totalorder %s32, 1
        %s382 = scalar_select %p381, %s32, 1
        %p383 = scmp.lt.s32.totalorder %s33, 0
        %s384 = scalar_select %p383, %s33, 0
        %s385 = sadd.s32 %s384, %s382
        %s386 = smul.addr %s385, 8
        %s387 = scalar_lea.vmem %s0, %s386
        %p388 = pneg %p69
        %p389 = pneg %p66
        %p390 = scmp.lt.s32.totalorder %s32, 1
        %s391 = scalar_select %p390, %s32, 1
        %p392 = scmp.lt.s32.totalorder %s34, 0
        %s393 = scalar_select %p392, %s34, 0
        %s394 = sadd.s32 %s393, %s391
        %s395 = smul.addr %s394, 8
        %s396 = scalar_lea.vmem %s1, %s395
        %p397 = pneg %p97
        %p398 = pneg %p94
        %p399 = scmp.lt.s32.totalorder %s32, 1
        %s400 = scalar_select %p399, %s32, 1
        %p401 = scmp.lt.s32.totalorder %s33, 0
        %s402 = scalar_select %p401, %s33, 0
        %s403 = sadd.s32 %s402, %s400
        %s404 = smul.addr %s403, 8
        %s405 = scalar_lea.vmem %s2, %s404
        %p406 = pneg %p125
        %p407 = pneg %p122
        %s408 = smul.u32 8, %s34
        %p409 = scmp.lt.s32.totalorder %s32, 1
        %s410 = scalar_select %p409, %s32, 1
        %p411 = scmp.lt.s32.totalorder %s408, 7
        %s412 = scalar_select %p411, %s408, 7
        %p413 = scmp.lt.s32.totalorder %s33, 0
        %s414 = scalar_select %p413, %s33, 0
        %s415 = sadd.s32 %s414, %s412
        %s416 = smul.addr %s410, 8
        %s417 = sadd.s32 %s415, %s416
        %s418 = smul.addr %s417, 8
        %s419 = scalar_lea.vmem %s3, %s418
        %p420 = pneg %p155
        %p421 = pneg %p152
        %p422 = pneg %p176
        %p423 = pneg %p173
        %p424 = pneg %p197
        %p425 = pneg %p194
        %p426 = pneg %p218
        %p427 = pneg %p215
        %p428 = pneg %p239
        %p429 = pneg %p236
        %p430 = pneg %p267
        %p431 = pneg %p264
        %s432 = sand.u32 %s254, 1
        %s433 = scalar_lea.sflag [#allocation3], %s432
        %s434 = sand.u32 %s254, 1
        %s435 = smul.addr %s434, 8
        %s436 = scalar_lea.vmem [#allocation2], %s435
        %p437 = pneg %p297
        %p438 = pneg %p294
        %s439 = sand.u32 %s284, 1
        %s440 = scalar_lea.sflag [#allocation5], %s439
        %s441 = sand.u32 %s284, 1
        %s442 = smul.addr %s441, 64
        %s443 = scalar_lea.vmem [#allocation4], %s442
        %p444 = scmp.lt.s32.totalorder %s32, 1
        %s445 = scalar_select %p444, %s32, 1
        %p446 = scmp.lt.s32.totalorder %s33, 0
        %s447 = scalar_select %p446, %s33, 0
        %s448 = sadd.s32 %s447, %s445
        %s449 = smul.addr %s448, 8
        %s450 = scalar_lea.vmem %s0, %s449
        %p451 = scmp.lt.s32.totalorder %s32, 1
        %s452 = scalar_select %p451, %s32, 1
        %p453 = scmp.lt.s32.totalorder %s34, 0
        %s454 = scalar_select %p453, %s34, 0
        %s455 = sadd.s32 %s454, %s452
        %s456 = smul.addr %s455, 8
        %s457 = scalar_lea.vmem %s1, %s456
        %p458 = scmp.lt.s32.totalorder %s32, 1
        %s459 = scalar_select %p458, %s32, 1
        %p460 = scmp.lt.s32.totalorder %s33, 0
        %s461 = scalar_select %p460, %s33, 0
        %s462 = sadd.s32 %s461, %s459
        %s463 = smul.addr %s462, 8
        %s464 = scalar_lea.vmem %s2, %s463
        %s465 = smul.u32 8, %s34
        %p466 = scmp.lt.s32.totalorder %s32, 1
        %s467 = scalar_select %p466, %s32, 1
        %p468 = scmp.lt.s32.totalorder %s465, 7
        %s469 = scalar_select %p468, %s465, 7
        %p470 = scmp.lt.s32.totalorder %s33, 0
        %s471 = scalar_select %p470, %s33, 0
        %s472 = sadd.s32 %s471, %s469
        %s473 = smul.addr %s467, 8
        %s474 = sadd.s32 %s472, %s473
        %s475 = smul.addr %s474, 8
        %s476 = scalar_lea.vmem %s3, %s475
        %s477 = smul.u32 8, %s34
        %s478 = smul.u32 8, %s34
        %p479 = scmp.eq.s32.totalorder %s34, 0
        // Predicated region
        $region53: #{tpu_custom_call.1} parent=51 // pred_check
          %p480 = pneg %p479
        $region54: #{tpu_custom_call.1} parent=51 // pred_check_branch
          %482 = sbr.rel (%p480) target = $region56
        $region55: #{tpu_custom_call.1} parent=51 // pred_region
          %v483 = vld [vmem:[%s450] sm:$0xff]
          %vm484 = vcmask 261120
          %485 = vst.msk [vmem:[%s436] sm:$0xff] %vm484, %v483
        $region56: #{tpu_custom_call.1} parent=51 // pred_fallthru
          _
        %v486 = vld [vmem:[%s476] sm:$0xff]
        %v487 = vld [vmem:[%s476 + $0x8] sm:$0xff]
        %v488 = vld [vmem:[%s476 + $0x10] sm:$0xff]
        %v489 = vld [vmem:[%s476 + $0x18] sm:$0xff]
        %v490 = vld [vmem:[%s476 + $0x20] sm:$0xff]
        %v491 = vld [vmem:[%s476 + $0x28] sm:$0xff]
        %v492 = vld [vmem:[%s476 + $0x30] sm:$0xff]
        %v493 = vld [vmem:[%s476 + $0x38] sm:$0xff]
        %v494 = vld [vmem:[%s4] sm:$0x7f]
        %vm495 = vcmask 56320
        %v497 = vsel %vm495, %v486, 0
        %v500 = vsel %vm495, %v487, 0
        %v503 = vsel %vm495, %v488, 0
        %v506 = vsel %vm495, %v489, 0
        %v509 = vsel %vm495, %v490, 0
        %v512 = vsel %vm495, %v491, 0
        %v515 = vsel %vm495, %v492, 0
        %v518 = vsel %vm495, %v493, 0
        %vm520 = vcmask 1046528
        %v522 = vsel %vm520, %v494, 0
        %524 = vmatprep.subr.mxu0 0.0
        %525 = vmatpush1.msra.mxu0 %v522
        %526 = vmatprep.subr.mxu0 0.0
        %527 = vmatpush1.msra.mxu0 0.0
        %528 = vmatprep.subr.mxu0 0.0
        %529 = vmatpush1.msra.mxu0 0.0
        %530 = vmatprep.subr.mxu0 0.0
        %531 = vmatpush1.msra.mxu0 0.0
        %532 = vmatprep.subr.mxu0 0.0
        %533 = vmatpush1.msra.mxu0 0.0
        %534 = vmatprep.subr.mxu0 0.0
        %535 = vmatpush1.msra.mxu0 0.0
        %536 = vmatprep.subr.mxu0 0.0
        %537 = vmatpush1.msra.mxu0 0.0
        %538 = vmatprep.subr.mxu0 0.0
        %539 = vmatpush1.msra.mxu0 0.0
        %540 = vmatprep.subr.mxu0 0.0
        %541 = vmatpush1.msra.mxu0 0.0
        %542 = vmatprep.subr.mxu0 0.0
        %543 = vmatpush1.msra.mxu0 0.0
        %544 = vmatprep.subr.mxu0 0.0
        %545 = vmatpush1.msra.mxu0 0.0
        %546 = vmatprep.subr.mxu0 0.0
        %547 = vmatpush1.msra.mxu0 0.0
        %548 = vmatprep.subr.mxu0 0.0
        %549 = vmatpush1.msra.mxu0 0.0
        %550 = vmatprep.subr.mxu0 0.0
        %551 = vmatpush1.msra.mxu0 0.0
        %552 = vmatprep.subr.mxu0 0.0
        %553 = vmatpush1.msra.mxu0 0.0
        %554 = vmatprep.subr.mxu0 0.0
        %555 = vmatpush1.msra.mxu0 0.0
        %556 = vmatprep.subr.mxu0 0.0
        %557 = vmatpush1.msra.mxu0 0.0
        %558 = vmatprep.subr.mxu0 0.0
        %559 = vmatpush1.msra.mxu0 0.0
        %560 = vmatprep.subr.mxu0 0.0
        %561 = vmatpush1.msra.mxu0 0.0
        %562 = vmatprep.subr.mxu0 0.0
        %563 = vmatpush1.msra.mxu0 0.0
        %564 = vmatprep.subr.mxu0 0.0
        %565 = vmatpush1.msra.mxu0 0.0
        %566 = vmatprep.subr.mxu0 0.0
        %567 = vmatpush1.msra.mxu0 0.0
        %568 = vmatprep.subr.mxu0 0.0
        %569 = vmatpush1.msra.mxu0 0.0
        %570 = vmatprep.subr.mxu0 0.0
        %571 = vmatpush1.msra.mxu0 0.0
        %572 = vmatprep.subr.mxu0 0.0
        %573 = vmatpush1.msra.mxu0 0.0
        %574 = vmatprep.subr.mxu0 0.0
        %575 = vmatpush1.msra.mxu0 0.0
        %576 = vmatprep.subr.mxu0 0.0
        %577 = vmatpush1.msra.mxu0 0.0
        %578 = vmatprep.subr.mxu0 0.0
        %579 = vmatpush1.msra.mxu0 0.0
        %580 = vmatprep.subr.mxu0 0.0
        %581 = vmatpush1.msra.mxu0 0.0
        %582 = vmatprep.subr.mxu0 0.0
        %583 = vmatpush1.msra.mxu0 0.0
        %584 = vmatprep.subr.mxu0 0.0
        %585 = vmatpush1.msra.mxu0 0.0
        %586 = vmatprep.subr.mxu0 0.0
        %587 = vmatpush1.msra.mxu0 0.0
        %588 = vmatprep.mubr.f32.mxu0 0.0
        %589 = vmatmul.mubr.f32.gmra.mrb[0].mxu0 %v497
        %v590 = vpop.f32.mrb[0].mxu0
        %v591 = vadd.f32 0.0, %v590
        %v592 = vpop.f32.mrb[0].mxu0
        %593 = vmatprep.mubr.f32.mxu0 0.0
        %594 = vmatmul.mubr.f32.gmra.mrb[0].mxu0 %v500
        %v595 = vpop.f32.mrb[0].mxu0
        %v596 = vadd.f32 0.0, %v595
        %v597 = vpop.f32.mrb[0].mxu0
        %598 = vmatprep.mubr.f32.mxu0 0.0
        %599 = vmatmul.mubr.f32.gmra.mrb[0].mxu0 %v503
        %v600 = vpop.f32.mrb[0].mxu0
        %v601 = vadd.f32 0.0, %v600
        %v602 = vpop.f32.mrb[0].mxu0
        %603 = vmatprep.mubr.f32.mxu0 0.0
        %604 = vmatmul.mubr.f32.gmra.mrb[0].mxu0 %v506
        %v605 = vpop.f32.mrb[0].mxu0
        %v606 = vadd.f32 0.0, %v605
        %v607 = vpop.f32.mrb[0].mxu0
        %608 = vmatprep.mubr.f32.mxu0 0.0
        %609 = vmatmul.mubr.f32.gmra.mrb[0].mxu0 %v509
        %v610 = vpop.f32.mrb[0].mxu0
        %v611 = vadd.f32 0.0, %v610
        %v612 = vpop.f32.mrb[0].mxu0
        %613 = vmatprep.mubr.f32.mxu0 0.0
        %614 = vmatmul.mubr.f32.gmra.mrb[0].mxu0 %v512
        %v615 = vpop.f32.mrb[0].mxu0
        %v616 = vadd.f32 0.0, %v615
        %v617 = vpop.f32.mrb[0].mxu0
        %618 = vmatprep.mubr.f32.mxu0 0.0
        %619 = vmatmul.mubr.f32.gmra.mrb[0].mxu0 %v515
        %v620 = vpop.f32.mrb[0].mxu0
        %v621 = vadd.f32 0.0, %v620
        %v622 = vpop.f32.mrb[0].mxu0
        %623 = vmatprep.mubr.f32.mxu0 0.0
        %624 = vmatmul.mubr.f32.gmra.mrb[0].mxu0 %v518
        %v625 = vpop.f32.mrb[0].mxu0
        %v626 = vadd.f32 0.0, %v625
        %v627 = vpop.f32.mrb[0].mxu0
        %628 = vdwg.mxu0
        %v629 = vld [vmem:[%s5] sm:$0x1]
        %v631 = vlaneseq
        %v632 = vshrl.u32 %v631, 7
        %v633 = vsub.s32 0, %v632
        %v634 = vrot.slane %v629, %v633
        %v636 = vadd.f32 %v591, %v634
        %v637 = vadd.f32 %v596, %v634
        %v638 = vadd.f32 %v601, %v634
        %v639 = vadd.f32 %v606, %v634
        %v640 = vadd.f32 %v611, %v634
        %v641 = vadd.f32 %v616, %v634
        %v642 = vadd.f32 %v621, %v634
        %v643 = vadd.f32 %v626, %v634
        %vm644 = vcmask 261120
        %645 = vst.msk [vmem:[%s443] sm:$0xff] %vm644, %v636
        %646 = vst.msk [vmem:[%s443 + $0x8] sm:$0xff] %vm644, %v637
        %647 = vst.msk [vmem:[%s443 + $0x10] sm:$0xff] %vm644, %v638
        %648 = vst.msk [vmem:[%s443 + $0x18] sm:$0xff] %vm644, %v639
        %649 = vst.msk [vmem:[%s443 + $0x20] sm:$0xff] %vm644, %v640
        %650 = vst.msk [vmem:[%s443 + $0x28] sm:$0xff] %vm644, %v641
        %651 = vst.msk [vmem:[%s443 + $0x30] sm:$0xff] %vm644, %v642
        %652 = vst.msk [vmem:[%s443 + $0x38] sm:$0xff] %vm644, %v643
        %v653 = vld [vmem:[%s457] sm:$0xff]
        %v655 = vcombine.high %v653, %v653
        %v657 = vunpack.c.l.s4 1966171168
        %v658 = vunpack.c.0.s8 %v657
        %v659 = vlaneseq
        %v660 = vshrl.u32 %v659, 7
        %v661 = vsub.s32 %v658, %v660
        %v662 = vrot.slane %v653, %v661
        %v664 = vunpack.c.l.s4 1966171168
        %v665 = vunpack.c.0.s8 %v664
        %v666 = vlaneseq
        %v667 = vshrl.u32 %v666, 7
        %v668 = vsub.s32 %v665, %v667
        %v669 = vrot.slane %v655, %v668
        %v670 = vcombine.high %v662, %v662
        %v671 = vcombine.high %v669, %v669
        %v673 = vunpack.c.l.s4 1966171168
        %v674 = vunpack.c.0.s8 %v673
        %v675 = vlaneseq
        %v676 = vshrl.u32 %v675, 7
        %v677 = vsub.s32 %v674, %v676
        %v678 = vrot.slane %v662, %v677
        %v680 = vunpack.c.l.s4 1966171168
        %v681 = vunpack.c.0.s8 %v680
        %v682 = vlaneseq
        %v683 = vshrl.u32 %v682, 7
        %v684 = vsub.s32 %v681, %v683
        %v685 = vrot.slane %v669, %v684
        %v687 = vunpack.c.l.s4 1966171168
        %v688 = vunpack.c.0.s8 %v687
        %v689 = vlaneseq
        %v690 = vshrl.u32 %v689, 7
        %v691 = vsub.s32 %v688, %v690
        %v692 = vrot.slane %v670, %v691
        %v694 = vunpack.c.l.s4 1966171168
        %v695 = vunpack.c.0.s8 %v694
        %v696 = vlaneseq
        %v697 = vshrl.u32 %v696, 7
        %v698 = vsub.s32 %v695, %v697
        %v699 = vrot.slane %v671, %v698
        %v700 = vcombine.high %v678, %v678
        %v701 = vcombine.high %v685, %v685
        %v702 = vcombine.high %v692, %v692
        %v703 = vcombine.high %v699, %v699
        %v704 = vlaneseq
        %v705 = vshrl.u32 %v704, 7
        %v706 = vsub.s32 0, %v705
        %v707 = vrot.slane %v678, %v706
        %v708 = vlaneseq
        %v709 = vshrl.u32 %v708, 7
        %v710 = vsub.s32 0, %v709
        %v711 = vrot.slane %v692, %v710
        %v712 = vlaneseq
        %v713 = vshrl.u32 %v712, 7
        %v714 = vsub.s32 0, %v713
        %v715 = vrot.slane %v700, %v714
        %v716 = vlaneseq
        %v717 = vshrl.u32 %v716, 7
        %v718 = vsub.s32 0, %v717
        %v719 = vrot.slane %v702, %v718
        %v720 = vlaneseq
        %v721 = vshrl.u32 %v720, 7
        %v722 = vsub.s32 0, %v721
        %v723 = vrot.slane %v685, %v722
        %v724 = vlaneseq
        %v725 = vshrl.u32 %v724, 7
        %v726 = vsub.s32 0, %v725
        %v727 = vrot.slane %v699, %v726
        %v728 = vlaneseq
        %v729 = vshrl.u32 %v728, 7
        %v730 = vsub.s32 0, %v729
        %v731 = vrot.slane %v701, %v730
        %v732 = vlaneseq
        %v733 = vshrl.u32 %v732, 7
        %v734 = vsub.s32 0, %v733
        %v735 = vrot.slane %v703, %v734
        %736 = vrot.lane.b32.xlu0 %v707, 32
        %v737 = vpop.permute.xlu0 %736
        %738 = vrot.lane.b32.xlu0 %v711, 32
        %v739 = vpop.permute.xlu0 %738
        %740 = vrot.lane.b32.xlu0 %v715, 32
        %v741 = vpop.permute.xlu0 %740
        %742 = vrot.lane.b32.xlu0 %v719, 32
        %v743 = vpop.permute.xlu0 %742
        %744 = vrot.lane.b32.xlu0 %v723, 32
        %v745 = vpop.permute.xlu0 %744
        %746 = vrot.lane.b32.xlu0 %v727, 32
        %v747 = vpop.permute.xlu0 %746
        %748 = vrot.lane.b32.xlu0 %v731, 32
        %v749 = vpop.permute.xlu0 %748
        %750 = vrot.lane.b32.xlu0 %v735, 32
        %v751 = vpop.permute.xlu0 %750
        %v760 = vadd.f32 %v591, %v737
        %v761 = vadd.f32 %v596, %v739
        %v762 = vadd.f32 %v601, %v741
        %v763 = vadd.f32 %v606, %v743
        %v764 = vadd.f32 %v611, %v745
        %v765 = vadd.f32 %v616, %v747
        %v766 = vadd.f32 %v621, %v749
        %v767 = vadd.f32 %v626, %v751
        %v768 = vld [vmem:[%s464] sm:$0xff]
        %770 = vrot.lane.b32.xlu0 %v768, 32
        %v771 = vpop.permute.xlu0 %770
        %v773 = vadd.f32 %v760, %v771
        %v774 = vadd.f32 %v761, %v771
        %v775 = vadd.f32 %v762, %v771
        %v776 = vadd.f32 %v763, %v771
        %v777 = vadd.f32 %v764, %v771
        %v778 = vadd.f32 %v765, %v771
        %v779 = vadd.f32 %v766, %v771
        %v780 = vadd.f32 %v767, %v771
        %v781 = vmax.f32 %v773, 0.0
        %v782 = vmax.f32 %v774, 0.0
        %v783 = vmax.f32 %v775, 0.0
        %v784 = vmax.f32 %v776, 0.0
        %v785 = vmax.f32 %v777, 0.0
        %v786 = vmax.f32 %v778, 0.0
        %v787 = vmax.f32 %v779, 0.0
        %v788 = vmax.f32 %v780, 0.0
        %v789 = vld [vmem:[%s6] sm:$0xff]
        %v790 = vld [vmem:[%s6 + $0x8] sm:$0xff]
        %v791 = vld [vmem:[%s6 + $0x10] sm:$0xff]
        %v792 = vld [vmem:[%s6 + $0x18] sm:$0xff]
        %v793 = vld [vmem:[%s7] sm:$0x1]
        %v795 = vlaneseq
        %v796 = vshrl.u32 %v795, 7
        %v797 = vsub.s32 0, %v796
        %v798 = vrot.slane %v793, %v797
        %808 = vrot.lane.b32.xlu0 %v781, 96
        %v809 = vpop.permute.xlu0 %808
        %810 = vrot.lane.b32.xlu0 %v782, 96
        %v811 = vpop.permute.xlu0 %810
        %812 = vrot.lane.b32.xlu0 %v783, 96
        %v813 = vpop.permute.xlu0 %812
        %814 = vrot.lane.b32.xlu0 %v784, 96
        %v815 = vpop.permute.xlu0 %814
        %816 = vrot.lane.b32.xlu0 %v785, 96
        %v817 = vpop.permute.xlu0 %816
        %818 = vrot.lane.b32.xlu0 %v786, 96
        %v819 = vpop.permute.xlu0 %818
        %820 = vrot.lane.b32.xlu0 %v787, 96
        %v821 = vpop.permute.xlu0 %820
        %822 = vrot.lane.b32.xlu0 %v788, 96
        %v823 = vpop.permute.xlu0 %822
        %v824 = vsel %vm644, %v809, 0
        %v826 = vsel %vm644, %v811, 0
        %v828 = vsel %vm644, %v813, 0
        %v830 = vsel %vm644, %v815, 0
        %v832 = vsel %vm644, %v817, 0
        %v834 = vsel %vm644, %v819, 0
        %v836 = vsel %vm644, %v821, 0
        %v838 = vsel %vm644, %v823, 0
        %840 = vmatprep.subr.mxu0 0.0
        %841 = vmatpush1.msra.mxu0 %v789
        %842 = vmatprep.subr.mxu0 0.0
        %843 = vmatpush1.msra.mxu0 %v790
        %844 = vmatprep.subr.mxu0 0.0
        %845 = vmatpush1.msra.mxu0 %v791
        %846 = vmatprep.subr.mxu0 0.0
        %847 = vmatpush1.msra.mxu0 %v792
        %848 = vmatprep.subr.mxu0 0.0
        %849 = vmatpush1.msra.mxu0 0.0
        %850 = vmatprep.subr.mxu0 0.0
        %851 = vmatpush1.msra.mxu0 0.0
        %852 = vmatprep.subr.mxu0 0.0
        %853 = vmatpush1.msra.mxu0 0.0
        %854 = vmatprep.subr.mxu0 0.0
        %855 = vmatpush1.msra.mxu0 0.0
        %856 = vmatprep.subr.mxu0 0.0
        %857 = vmatpush1.msra.mxu0 0.0
        %858 = vmatprep.subr.mxu0 0.0
        %859 = vmatpush1.msra.mxu0 0.0
        %860 = vmatprep.subr.mxu0 0.0
        %861 = vmatpush1.msra.mxu0 0.0
        %862 = vmatprep.subr.mxu0 0.0
        %863 = vmatpush1.msra.mxu0 0.0
        %864 = vmatprep.subr.mxu0 0.0
        %865 = vmatpush1.msra.mxu0 0.0
        %866 = vmatprep.subr.mxu0 0.0
        %867 = vmatpush1.msra.mxu0 0.0
        %868 = vmatprep.subr.mxu0 0.0
        %869 = vmatpush1.msra.mxu0 0.0
        %870 = vmatprep.subr.mxu0 0.0
        %871 = vmatpush1.msra.mxu0 0.0
        %872 = vmatprep.subr.mxu0 0.0
        %873 = vmatpush1.msra.mxu0 0.0
        %874 = vmatprep.subr.mxu0 0.0
        %875 = vmatpush1.msra.mxu0 0.0
        %876 = vmatprep.subr.mxu0 0.0
        %877 = vmatpush1.msra.mxu0 0.0
        %878 = vmatprep.subr.mxu0 0.0
        %879 = vmatpush1.msra.mxu0 0.0
        %880 = vmatprep.subr.mxu0 0.0
        %881 = vmatpush1.msra.mxu0 0.0
        %882 = vmatprep.subr.mxu0 0.0
        %883 = vmatpush1.msra.mxu0 0.0
        %884 = vmatprep.subr.mxu0 0.0
        %885 = vmatpush1.msra.mxu0 0.0
        %886 = vmatprep.subr.mxu0 0.0
        %887 = vmatpush1.msra.mxu0 0.0
        %888 = vmatprep.subr.mxu0 0.0
        %889 = vmatpush1.msra.mxu0 0.0
        %890 = vmatprep.subr.mxu0 0.0
        %891 = vmatpush1.msra.mxu0 0.0
        %892 = vmatprep.subr.mxu0 0.0
        %893 = vmatpush1.msra.mxu0 0.0
        %894 = vmatprep.subr.mxu0 0.0
        %895 = vmatpush1.msra.mxu0 0.0
        %896 = vmatprep.subr.mxu0 0.0
        %897 = vmatpush1.msra.mxu0 0.0
        %898 = vmatprep.subr.mxu0 0.0
        %899 = vmatpush1.msra.mxu0 0.0
        %900 = vmatprep.subr.mxu0 0.0
        %901 = vmatpush1.msra.mxu0 0.0
        %902 = vmatprep.subr.mxu0 0.0
        %903 = vmatpush1.msra.mxu0 0.0
        %904 = vmatprep.mubr.f32.mxu0 0.0
        %905 = vmatmul.mubr.f32.gmra.mrb[0].mxu0 %v824
        %v906 = vpop.f32.mrb[0].mxu0
        %v907 = vadd.f32 %v798, %v906
        %v908 = vpop.f32.mrb[0].mxu0
        %909 = vmatprep.mubr.f32.mxu0 0.0
        %910 = vmatmul.mubr.f32.gmra.mrb[0].mxu0 %v826
        %v911 = vpop.f32.mrb[0].mxu0
        %v912 = vadd.f32 %v798, %v911
        %v913 = vpop.f32.mrb[0].mxu0
        %914 = vmatprep.mubr.f32.mxu0 0.0
        %915 = vmatmul.mubr.f32.gmra.mrb[0].mxu0 %v828
        %v916 = vpop.f32.mrb[0].mxu0
        %v917 = vadd.f32 %v798, %v916
        %v918 = vpop.f32.mrb[0].mxu0
        %919 = vmatprep.mubr.f32.mxu0 0.0
        %920 = vmatmul.mubr.f32.gmra.mrb[0].mxu0 %v830
        %v921 = vpop.f32.mrb[0].mxu0
        %v922 = vadd.f32 %v798, %v921
        %v923 = vpop.f32.mrb[0].mxu0
        %924 = vmatprep.mubr.f32.mxu0 0.0
        %925 = vmatmul.mubr.f32.gmra.mrb[0].mxu0 %v832
        %v926 = vpop.f32.mrb[0].mxu0
        %v927 = vadd.f32 %v798, %v926
        %v928 = vpop.f32.mrb[0].mxu0
        %929 = vmatprep.mubr.f32.mxu0 0.0
        %930 = vmatmul.mubr.f32.gmra.mrb[0].mxu0 %v834
        %v931 = vpop.f32.mrb[0].mxu0
        %v932 = vadd.f32 %v798, %v931
        %v933 = vpop.f32.mrb[0].mxu0
        %934 = vmatprep.mubr.f32.mxu0 0.0
        %935 = vmatmul.mubr.f32.gmra.mrb[0].mxu0 %v836
        %v936 = vpop.f32.mrb[0].mxu0
        %v937 = vadd.f32 %v798, %v936
        %v938 = vpop.f32.mrb[0].mxu0
        %939 = vmatprep.mubr.f32.mxu0 0.0
        %940 = vmatmul.mubr.f32.gmra.mrb[0].mxu0 %v838
        %v941 = vpop.f32.mrb[0].mxu0
        %v942 = vadd.f32 %v798, %v941
        %v943 = vpop.f32.mrb[0].mxu0
        %944 = vdwg.mxu0
        %v945 = vmax.f32 %v907, 0.0
        %v946 = vmax.f32 %v912, 0.0
        %v947 = vmax.f32 %v917, 0.0
        %v948 = vmax.f32 %v922, 0.0
        %v949 = vmax.f32 %v927, 0.0
        %v950 = vmax.f32 %v932, 0.0
        %v951 = vmax.f32 %v937, 0.0
        %v952 = vmax.f32 %v942, 0.0
        %961 = vrot.lane.b32.xlu0 %v591, 64
        %v962 = vpop.permute.xlu0 %961
        %963 = vrot.lane.b32.xlu0 %v596, 64
        %v964 = vpop.permute.xlu0 %963
        %965 = vrot.lane.b32.xlu0 %v601, 64
        %v966 = vpop.permute.xlu0 %965
        %967 = vrot.lane.b32.xlu0 %v606, 64
        %v968 = vpop.permute.xlu0 %967
        %969 = vrot.lane.b32.xlu0 %v611, 64
        %v970 = vpop.permute.xlu0 %969
        %971 = vrot.lane.b32.xlu0 %v616, 64
        %v972 = vpop.permute.xlu0 %971
        %973 = vrot.lane.b32.xlu0 %v621, 64
        %v974 = vpop.permute.xlu0 %973
        %975 = vrot.lane.b32.xlu0 %v626, 64
        %v976 = vpop.permute.xlu0 %975
        %v985 = vmul.f32 %v945, %v962
        %v986 = vmul.f32 %v946, %v964
        %v987 = vmul.f32 %v947, %v966
        %v988 = vmul.f32 %v948, %v968
        %v989 = vmul.f32 %v949, %v970
        %v990 = vmul.f32 %v950, %v972
        %v991 = vmul.f32 %v951, %v974
        %v992 = vmul.f32 %v952, %v976
        %v993 = vld [vmem:[%s436] sm:$0xff]
        %v994 = vsel %vm644, %v985, 0.0
        %v995 = vsel %vm644, %v986, 0.0
        %v996 = vadd.f32 %v994, %v995
        %v997 = vsel %vm644, %v987, 0.0
        %v998 = vadd.f32 %v996, %v997
        %v999 = vsel %vm644, %v988, 0.0
        %v1000 = vadd.f32 %v998, %v999
        %v1001 = vsel %vm644, %v989, 0.0
        %v1002 = vadd.f32 %v1000, %v1001
        %v1003 = vsel %vm644, %v990, 0.0
        %v1004 = vadd.f32 %v1002, %v1003
        %v1005 = vsel %vm644, %v991, 0.0
        %v1006 = vadd.f32 %v1004, %v1005
        %v1007 = vsel %vm644, %v992, 0.0
        %v1008 = vadd.f32 %v1006, %v1007
        %v1009 = vadd.f32 %v993, %v1008
        %1010 = vst.msk [vmem:[%s436] sm:$0xff] %vm644, %v1009
        %s1011 = sand.u32 %s254, 1
        %s1012 = scalar_lea.sflag [#allocation3], %s1011
        %s1013 = sand.u32 %s254, 1
        %s1014 = smul.addr %s1013, 8
        %s1015 = scalar_lea.vmem [#allocation2], %s1014
        %s1016 = sand.u32 %s284, 1
        %s1017 = scalar_lea.sflag [#allocation5], %s1016
        %s1018 = sand.u32 %s284, 1
        %s1019 = smul.addr %s1018, 64
        %s1020 = scalar_lea.vmem [#allocation4], %s1019
        // Predicated region
        $region57: #{tpu_custom_call.1} parent=51 // pred_check
          %p1021 = pneg %p264
        $region58: #{tpu_custom_call.1} parent=51 // pred_check_branch
          %1023 = sbr.rel (%p1021) target = $region60
        $region59: #{tpu_custom_call.1} parent=51 // pred_region
          %s1025 = ssub.s32 128, 128
          %1026 = vsyncadd %s1012, %s1025
          %s1027 = sadd.s32 %s33, %s32
          %s1028 = smul.addr %s1027, 128
          %s1029 = scalar_lea.hbm %s8, %s1028
          %s1031 = sshll.u32 %s1015, 4
          %s1032 = int_to_ptr.vmem [resolvable:$true] %s1031
          %1034 = dma.vmem_to_hbm [thread:$0]  %s1032, 128, %s1029, %s1012
        $region60: #{tpu_custom_call.1} parent=51 // pred_fallthru
          _
        // Predicated region
        $region61: #{tpu_custom_call.1} parent=51 // pred_check
          %p1035 = pneg %p294
        $region62: #{tpu_custom_call.1} parent=51 // pred_check_branch
          %1037 = sbr.rel (%p1035) target = $region64
        $region63: #{tpu_custom_call.1} parent=51 // pred_region
          %s1038 = smul.u32 8, %s34
          %s1040 = ssub.s32 1024, 1024
          %1041 = vsyncadd %s1017, %s1040
          %s1042 = sadd.s32 %s33, %s1038
          %s1043 = smul.addr %s32, 8
          %s1044 = sadd.s32 %s1042, %s1043
          %s1045 = smul.addr %s1044, 128
          %s1046 = scalar_lea.hbm %s9, %s1045
          %s1047 = sshll.u32 %s1020, 4
          %s1048 = int_to_ptr.vmem [resolvable:$true] %s1047
          %1053 = dma.vmem_to_hbm [thread:$0]  %s1048, 1024, %s1046, %s1017, 128, 128, 8
        $region64: #{tpu_custom_call.1} parent=51 // pred_fallthru
          _
      $region52: #{tpu_custom_call.1} parent=5 // pred_fallthru
        _
      %p1054 = scmp.le.s32.totalorder 2, %s22
      // Predicated region
      $region65: #{tpu_custom_call.1} parent=5 // pred_check
        %p1055 = pneg %p1054
      $region66: #{tpu_custom_call.1} parent=5 // pred_check_branch
        %1057 = sbr.rel (%p1055) target = $region68
      $region67: #{tpu_custom_call.1} parent=5 // pred_region
        %s1058 = ssub.s32 %s22, 2
        // Predicated region
        $region69: #{tpu_custom_call.1} parent=67 // pred_check
          %p1059 = pneg %p270
        $region70: #{tpu_custom_call.1} parent=67 // pred_check_branch
          %1061 = sbr.rel (%p1059) target = $region72
        $region71: #{tpu_custom_call.1} parent=67 // pred_region
          %s1062 = sand.u32 %s255, 1
          %s1063 = scalar_lea.sflag [#allocation3], %s1062
          %s1064 = sand.u32 %s255, 1
          %s1065 = smul.addr %s1064, 8
          %s1066 = scalar_lea.vmem [#allocation2], %s1065
          %1067 = dma.done %s1063, 128
        $region72: #{tpu_custom_call.1} parent=67 // pred_fallthru
          _
        // Predicated region
        $region73: #{tpu_custom_call.1} parent=67 // pred_check
          %p1068 = pneg %p300
        $region74: #{tpu_custom_call.1} parent=67 // pred_check_branch
          %1070 = sbr.rel (%p1068) target = $region76
        $region75: #{tpu_custom_call.1} parent=67 // pred_region
          %s1071 = sand.u32 %s285, 1
          %s1072 = scalar_lea.sflag [#allocation5], %s1071
          %s1073 = sand.u32 %s285, 1
          %s1074 = smul.addr %s1073, 64
          %s1075 = scalar_lea.vmem [#allocation4], %s1074
          %1076 = dma.done %s1072, 1024
        $region76: #{tpu_custom_call.1} parent=67 // pred_fallthru
          _
      $region68: #{tpu_custom_call.1} parent=5 // pred_fallthru
        _
    $region6: #{tpu_custom_call.1} parent=1 // loop_footer
      %s26 = sadd.s32 1, %s22
    $region7: #{tpu_custom_call.1} parent=1 // loop_footer_branch
      %21 = sbr.rel target = $region3
    $region8: #{tpu_custom_call.1} parent=1 // loop_exit
      _
    %1077 = vsyncpa [#allocation3], 1
    %s1078 = scalar_lea.sflag [#allocation3], 1
    %1079 = vsyncpa %s1078, 1
    %1080 = vsyncpa [#allocation5], 1
    %s1081 = scalar_lea.sflag [#allocation5], 1
    %1082 = vsyncpa %s1081, 1

</llo_original>
